<compile_context>
chip_gen: v7x
topology: tpu7x:2x2x1
jax: 0.10.0
libtpu: 0.0.40
codegen_flags: <defaults>
</compile_context>

<pallas_src>
import functools

import jax
import jax.numpy as jnp
from jax.experimental import pallas as pl
from jax.experimental.pallas import tpu as pltpu

LANES = 128
SUBLANES = 8
# Rows per in-kernel chunk (512 x 128 f32 = 256 KiB/operand): keeps Mosaic's
# per-chunk intermediate to ~64 vregs instead of one (8192,128) value with a
# 1024-way reduce fan-in (avoids vreg-pressure / spill blowups).
CHUNK_ROWS = 512
# (8192, 128) f32 = 4 MiB per input block; 2 inputs x 2 pipeline buffers =
# 16 MiB VMEM -> ~6 us of HBM per grid step on v6e (~2.6 us/core on v7x),
# amortizing the ~0.35 us/step overhead.  vmem_limit_bytes is raised
# explicitly so this also holds past v5e's 16 MiB default scoped limit while
# staying well under v7x's 64 MiB per-TensorCore physical VMEM.
MAX_BLOCK_ROWS = 8192
# Leading "parallel" grid axis: row range is sharded across both TensorCores
# on v7x (megacore).  On v5e/v6e (1 TC/chip) it simply becomes two sequential
# passes over disjoint row ranges — same total work, no regression.
NUM_SPLITS = 2

CLIP_LO = 1e-5
CLIP_HI = 1.0 - 1e-5


def _log_likelihood(yp, yt):
    """y*log(clamp(yp)) + (1-y)*log(1-clamp(yp)). The -1 and /N live in the wrapper."""
    yp = jnp.clip(yp.astype(jnp.float32), CLIP_LO, CLIP_HI)
    yt = yt.astype(jnp.float32)
    # Keep the general two-log BCE form (valid for soft labels, matches torch).
    return yt * jnp.log(yp) + (1.0 - yt) * jnp.log(1.0 - yp)


def _nll_kernel(yp_ref, y_ref, out_ref, *, block_rows, rows, bps, blocks_total,
                needs_mask):
    c = pl.program_id(0)          # TensorCore split (parallel)
    i = pl.program_id(1)          # sequential blocks within this split
    gb = c * bps + i              # global (unclamped) block index

    @pl.when(i == 0)
    def _():
        out_ref[...] = jnp.zeros_like(out_ref)

    def chunk_sum(row_off, nrows, acc, masked):
        ll = _log_likelihood(yp_ref[pl.ds(row_off, nrows), :],
                             y_ref[pl.ds(row_off, nrows), :])
        if masked:
            grow = (gb * block_rows + row_off
                    + jax.lax.broadcasted_iota(jnp.int32, (nrows, LANES), 0))
            # Keep the select (NOT arithmetic masking): garbage rows beyond the
            # array bound may hold NaN/Inf after clip/log; `where` discards them.
            ll = jnp.where(grow < rows, ll, 0.0)
        # (nrows,128) -> (nrows//8, 8, 128) leading-axis sum lowers to plain
        # VPU vreg adds into the (8,128) accumulator (no XLU reduce per step).
        return acc + ll.reshape(nrows // SUBLANES, SUBLANES, LANES).sum(axis=0)

    def block_sum(masked):
        acc = jnp.zeros((SUBLANES, LANES), jnp.float32)
        n_full = block_rows // CHUNK_ROWS
        rem_rows = block_rows % CHUNK_ROWS      # multiple of 8 by construction
        if n_full > 0:
            def body(k, a):
                off = pl.multiple_of(k * CHUNK_ROWS, CHUNK_ROWS)
                return chunk_sum(off, CHUNK_ROWS, a, masked)
            acc = jax.lax.fori_loop(0, n_full, body, acc, unroll=2)
        if rem_rows:
            acc = chunk_sum(n_full * CHUNK_ROWS, rem_rows, acc, masked)
        return acc

    if needs_mask:
        # Full blocks take the unmasked fast path; only the ragged last real
        # block and (at most one) phantom block pay for iota/compare/select.
        @pl.when(gb < blocks_total - 1)
        def _():
            out_ref[...] += block_sum(masked=False).reshape(1, SUBLANES, LANES)

        @pl.when(gb >= blocks_total - 1)
        def _():
            out_ref[...] += block_sum(masked=True).reshape(1, SUBLANES, LANES)
    else:
        out_ref[...] += block_sum(masked=False).reshape(1, SUBLANES, LANES)


def _nll_partial_sums(yp2d, y2d, rows):
    """Returns (NUM_SPLITS, 8, 128) per-core partial sums of the log-likelihood."""
    # Split rows roughly evenly across the two cores; blocks are multiples of 8.
    per_split = pl.cdiv(rows, NUM_SPLITS)
    block_rows = min(MAX_BLOCK_ROWS,
                     ((per_split + SUBLANES - 1) // SUBLANES) * SUBLANES)
    blocks_total = pl.cdiv(rows, block_rows)
    bps = pl.cdiv(blocks_total, NUM_SPLITS)     # blocks per split (core)
    needs_mask = (blocks_total * block_rows != rows) or (NUM_SPLITS * bps != blocks_total)

    kernel = functools.partial(
        _nll_kernel, block_rows=block_rows, rows=rows, bps=bps,
        blocks_total=blocks_total, needs_mask=needs_mask)

    def in_map(c, i):
        # Clamp the (at most one) phantom trailing block on the second core to
        # the last real block; its contribution is zeroed by the in-kernel mask.
        return (jnp.minimum(c * bps + i, blocks_total - 1), 0)

    block_bytes = block_rows * LANES * max(yp2d.dtype.itemsize, y2d.dtype.itemsize)
    # 2 inputs x 2 pipeline buffers + generous headroom for Mosaic temporaries;
    # fits every generation (v7x: 64 MiB physical per TensorCore).
    vmem_limit = 2 * 2 * block_bytes + (16 << 20)

    n_elems = rows * LANES
    cost = pl.CostEstimate(
        flops=9 * n_elems,
        transcendentals=2 * n_elems,
        bytes_accessed=(yp2d.dtype.itemsize + y2d.dtype.itemsize) * n_elems
        + NUM_SPLITS * SUBLANES * LANES * 4,
    )

    return pl.pallas_call(
        kernel,
        out_shape=jax.ShapeDtypeStruct((NUM_SPLITS, SUBLANES, LANES), jnp.float32),
        grid_spec=pltpu.PrefetchScalarGridSpec(
            num_scalar_prefetch=0,
            grid=(NUM_SPLITS, bps),
            in_specs=[
                pl.BlockSpec((block_rows, LANES), in_map),
                pl.BlockSpec((block_rows, LANES), in_map),
            ],
            out_specs=pl.BlockSpec((1, SUBLANES, LANES), lambda c, i: (c, 0, 0)),
        ),
        compiler_params=pltpu.CompilerParams(
            dimension_semantics=("parallel", "arbitrary"),
            vmem_limit_bytes=vmem_limit),
        cost_estimate=cost,
    )(yp2d, y2d)


def nll_manual_loss(y_pred, y):
    """Pallas TPU equivalent of NLL_Manual_Loss.forward (returns scalar f32)."""
    assert y_pred.shape == y.shape
    n_valid = int(y_pred.size)
    if n_valid == 0:
        return jnp.float32(jnp.nan)   # mean over empty tensor

    yp_flat = y_pred.reshape(-1)
    y_flat = y.reshape(-1)

    rem = n_valid % LANES
    n_aligned = n_valid - rem
    rows = n_aligned // LANES

    # <=127-element ragged tail: tiny plain-JAX reduction instead of padding
    # (jnp.pad would re-read + re-write both full inputs in HBM).
    if rem:
        tail = jnp.sum(_log_likelihood(yp_flat[n_aligned:], y_flat[n_aligned:]))
    else:
        tail = jnp.float32(0.0)

    # TODO(synk): optionally bypass the pallas_call entirely for tiny inputs
    # (launch overhead dominates) and use compensated / hierarchical summation
    # if f32 drift matters for N in the hundreds of millions.
    if rows == 0:
        total = tail
    else:
        yp2d = (yp_flat[:n_aligned] if rem else yp_flat).reshape(rows, LANES)
        y2d = (y_flat[:n_aligned] if rem else y_flat).reshape(rows, LANES)
        partial = _nll_partial_sums(yp2d, y2d, rows)
        total = jnp.sum(partial) + tail

    # Fold the -1.0 and the mean's /N into the final scalar.
    return -total / jnp.float32(n_valid)


def _reference(y_pred, y):
    yp = jnp.clip(y_pred.astype(jnp.float32), 1e-5, 1.0 - 1e-5)
    y = y.astype(jnp.float32)
    nll = -1.0 * (y * jnp.log(yp) + (1.0 - y) * jnp.log(1.0 - yp))
    return jnp.mean(nll)


if __name__ == "__main__":
    key = jax.random.PRNGKey(0)
    k1, k2, k3, k4 = jax.random.split(key, 4)

    # NCHW, small shapes: batch=2, channels=4, spatial=16x16 (lane-aligned case)
    shape = (2, 4, 16, 16)
    y_pred = jax.random.uniform(k1, shape, dtype=jnp.float32)          # probs in [0, 1)
    y = (jax.random.uniform(k2, shape, dtype=jnp.float32) > 0.5).astype(jnp.float32)

    loss = jax.block_until_ready(nll_manual_loss(y_pred, y))
    ref = _reference(y_pred, y)
    assert jnp.allclose(loss, ref, rtol=1e-5, atol=1e-6), (loss, ref)

    # Non-lane-aligned case: exercises the ragged-block mask + plain-JAX tail.
    shape2 = (3, 5, 7, 11)   # 1155 elements, 1155 % 128 != 0
    y_pred2 = jax.random.uniform(k3, shape2, dtype=jnp.float32)
    y2 = (jax.random.uniform(k4, shape2, dtype=jnp.float32) > 0.5).astype(jnp.float32)

    loss2 = jax.block_until_ready(nll_manual_loss(y_pred2, y2))
    ref2 = _reference(y_pred2, y2)
    assert jnp.allclose(loss2, ref2, rtol=1e-5, atol=1e-6), (loss2, ref2)

    print("KERNEL_OK")
</pallas_src>

<mosaic_0001>
module attributes {stable_mosaic.version = 11 : i64} {
  func.func @_nll_kernel(%arg0: i32, %arg1: i32, %arg2: memref<8x128xf32, #tpu.memory_space<vmem>>, %arg3: memref<8x128xf32, #tpu.memory_space<vmem>>, %arg4: memref<1x8x128xf32, #tpu.memory_space<vmem>>) attributes {dimension_semantics = [#tpu.dimension_semantics<parallel>, #tpu.dimension_semantics<arbitrary>], iteration_bounds = array<i64: 2, 1>, scalar_prefetch = 0 : i64, scratch_operands = 0 : i64, tpu.core_type = #tpu.core_type<tc>, window_params = [{transform_indices = @transform_0, window_bounds = array<i64: 8, 128>}, {transform_indices = @transform_1, window_bounds = array<i64: 8, 128>}, {transform_indices = @transform_2, window_bounds = array<i64: 1, 8, 128>}]} {
    %c0_i32 = arith.constant 0 : i32
    %0 = arith.cmpi eq, %arg1, %c0_i32 : i32
    %1 = arith.extui %0 : i1 to i32
    %c0_i32_0 = arith.constant 0 : i32
    %2 = arith.cmpi ne, %1, %c0_i32_0 : i32
    scf.if %2 {
      %cst_15 = arith.constant 0.000000e+00 : f32
      %26 = vector.broadcast %cst_15 : f32 to vector<1x8x128xf32>
      %c0_16 = arith.constant 0 : index
      %c0_17 = arith.constant 0 : index
      %c0_18 = arith.constant 0 : index
      %27 = vector.load %arg4[%c0_16, %c0_17, %c0_18] : memref<1x8x128xf32, #tpu.memory_space<vmem>>, vector<1x8x128xf32>
      tpu.vector_store %arg4[%c0_16, %c0_17, %c0_18], %26 {strides = array<i32>} : memref<1x8x128xf32, #tpu.memory_space<vmem>>, vector<1x8x128xf32>,
    } else {
    }
    %c0 = arith.constant 0 : index
    %c0_1 = arith.constant 0 : index
    %c0_2 = arith.constant 0 : index
    %3 = vector.load %arg4[%c0, %c0_1, %c0_2] : memref<1x8x128xf32, #tpu.memory_space<vmem>>, vector<1x8x128xf32>
    %cst = arith.constant 0.000000e+00 : f32
    %4 = vector.broadcast %cst : f32 to vector<8x128xf32>
    %c0_3 = arith.constant 0 : index
    %c0_4 = arith.constant 0 : index
    %5 = vector.load %arg2[%c0_3, %c0_4] : memref<8x128xf32, #tpu.memory_space<vmem>>, vector<8x128xf32>
    %c0_5 = arith.constant 0 : index
    %c0_6 = arith.constant 0 : index
    %6 = vector.load %arg3[%c0_5, %c0_6] : memref<8x128xf32, #tpu.memory_space<vmem>>, vector<8x128xf32>
    %cst_7 = arith.constant 9.99999974E-6 : f32
    %cst_8 = arith.constant 0.999989986 : f32
    %7 = vector.broadcast %cst_7 : f32 to vector<8x128xf32>
    %8 = arith.maximumf %7, %5 : vector<8x128xf32>
    %9 = vector.broadcast %cst_8 : f32 to vector<8x128xf32>
    %10 = arith.minimumf %9, %8 : vector<8x128xf32>
    %11 = math.log %10 : vector<8x128xf32>
    %12 = arith.mulf %6, %11 : vector<8x128xf32>
    %cst_9 = arith.constant 1.000000e+00 : f32
    %13 = vector.broadcast %cst_9 : f32 to vector<8x128xf32>
    %14 = arith.subf %13, %6 : vector<8x128xf32>
    %cst_10 = arith.constant 1.000000e+00 : f32
    %15 = vector.broadcast %cst_10 : f32 to vector<8x128xf32>
    %16 = arith.subf %15, %10 : vector<8x128xf32>
    %17 = math.log %16 : vector<8x128xf32>
    %18 = arith.mulf %14, %17 : vector<8x128xf32>
    %19 = arith.addf %12, %18 : vector<8x128xf32>
    %20 = vector.shape_cast %19 : vector<8x128xf32> to vector<1x8x128xf32>
    %cst_11 = arith.constant dense<0.000000e+00> : vector<8x128xf32>
    %21 = vector.multi_reduction <add>, %20, %cst_11 [0] : vector<1x8x128xf32> to vector<8x128xf32>
    %22 = arith.addf %4, %21 : vector<8x128xf32>
    %23 = vector.shape_cast %22 : vector<8x128xf32> to vector<1x8x128xf32>
    %24 = arith.addf %3, %23 : vector<1x8x128xf32>
    %c0_12 = arith.constant 0 : index
    %c0_13 = arith.constant 0 : index
    %c0_14 = arith.constant 0 : index
    %25 = vector.load %arg4[%c0_12, %c0_13, %c0_14] : memref<1x8x128xf32, #tpu.memory_space<vmem>>, vector<1x8x128xf32>
    tpu.vector_store %arg4[%c0_12, %c0_13, %c0_14], %24 {strides = array<i32>} : memref<1x8x128xf32, #tpu.memory_space<vmem>>, vector<1x8x128xf32>,
    return
  }
  func.func @transform_0(%arg0: i32, %arg1: i32) -> (i32, i32) {
    %c1_i32 = arith.constant 1 : i32
    %0 = arith.muli %arg0, %c1_i32 : i32
    %1 = arith.addi %0, %arg1 : i32
    %c1_i32_0 = arith.constant 1 : i32
    %2 = arith.minsi %1, %c1_i32_0 : i32
    %c0_i32 = arith.constant 0 : i32
    %c0_i32_1 = arith.constant 0 : i32
    return %2, %c0_i32 : i32, i32
  }
  func.func @transform_1(%arg0: i32, %arg1: i32) -> (i32, i32) {
    %c1_i32 = arith.constant 1 : i32
    %0 = arith.muli %arg0, %c1_i32 : i32
    %1 = arith.addi %0, %arg1 : i32
    %c1_i32_0 = arith.constant 1 : i32
    %2 = arith.minsi %1, %c1_i32_0 : i32
    %c0_i32 = arith.constant 0 : i32
    %c0_i32_1 = arith.constant 0 : i32
    return %2, %c0_i32 : i32, i32
  }
  func.func @transform_2(%arg0: i32, %arg1: i32) -> (i32, i32, i32) {
    %c0_i32 = arith.constant 0 : i32
    %c0_i32_0 = arith.constant 0 : i32
    %c0_i32_1 = arith.constant 0 : i32
    return %arg0, %c0_i32, %c0_i32_0 : i32, i32, i32
  }
}

</mosaic_0001>

<llo_original>
// kernel: tpu_custom_call.1
$region0: #{tpu_custom_call.1}
  #allocation0 [shape = 'u32[]', space=smem, size = 0x4, offset = 0x4, fixed_abs, tag = 'smem constant byte address 0x4 - core index']
  #allocation1 [shape = 'u32[144,128]{1,0:T(1,128)}', space=vmem, size = 0x12000, scoped, tag = 'internal scratch']
  %s0 = inlined_call_operand.hbm [shape: f32[16,128], index: 0, kind: input, shape index: {}]
  %s1 = inlined_call_operand.hbm [shape: f32[16,128], index: 1, kind: input, shape index: {}]
  %s2 = inlined_call_operand.hbm [shape: f32[2,8,128], index: 2, kind: output, shape index: {}]
  %s3 = sld [smem:[#allocation0]]
  $region53: #{tpu_custom_call.1} parent=0
    _
  %s5 = ssub.s32 1, %s3
  %s6 = scalar_select 0, %s5, %s3
  $region1: #{tpu_custom_call.1} parent=0
    #allocation2 [shape = 'u8[8192]{0}', space=vmem, size = 0x2000, scoped, tag = 'input window, operand 0']
    #allocation3 [shape = 's32[2]{0}', space=sflag, size = 0x8, scoped, tag = 'scoped memory for tpu_custom_call.1']
    #allocation4 [shape = 's32[2]{0}', space=sflag, size = 0x8, scoped, tag = 'scoped memory for tpu_custom_call.1']
    #allocation5 [shape = 'u8[8192]{0}', space=vmem, size = 0x2000, scoped, tag = 'input window, operand 1']
    #allocation6 [shape = 's32[2]{0}', space=sflag, size = 0x8, scoped, tag = 'scoped memory for tpu_custom_call.1']
    #allocation7 [shape = 'u8[8192]{0}', space=vmem, size = 0x2000, scoped, tag = 'output window, operand 0']
    %7 = vsyncpa [#allocation3], 0
    %s8 = scalar_lea.sflag [#allocation3], 1
    %9 = vsyncpa %s8, 0
    %10 = vsyncpa [#allocation6], 0
    %s11 = scalar_lea.sflag [#allocation6], 1
    %12 = vsyncpa %s11, 0
    %13 = vsyncpa [#allocation4], 0
    %s14 = scalar_lea.sflag [#allocation4], 1
    %15 = vsyncpa %s14, 0
    loop: start=0, step=1, limit=4
    $region2: #{tpu_custom_call.1} parent=1 // loop_pre_header
      _
    $region3: #{tpu_custom_call.1} parent=1 // loop_header
      %s17 = sphi 0, %s21
      %p18 = scmp.ge.s32.totalorder %s17, 4
      %s24 = sphi 0, %s36
      %s25 = sphi 0, %s32
      %s26 = sphi 0, %s24
      %s27 = sphi 0, %s25
      %s28 = sphi 0, %s26
      %s29 = sphi 0, %s27
      %s45 = sphi 0, %s47
      %s48 = sphi 0, %s45
      %s49 = sphi 0, %s48
      %s65 = sphi 0, %s49
      %s77 = sphi 0, %s79
      %s80 = sphi 0, %s77
      %s81 = sphi 0, %s80
      %s97 = sphi 0, %s81
      %s103 = sphi 0, %s105
      %s106 = sphi 0, %s103
      %s107 = sphi 0, %s106
      %s123 = sphi 0, %s107
    $region4: #{tpu_custom_call.1} parent=1 // loop_header_branch
      %20 = sbr.rel (%p18) target = $region8
    $region5: #{tpu_custom_call.1} parent=1 // loop_body
      %s22 = ssub.s32 %s17, 1
      %s23 = ssub.s32 %s17, 2
      %s30 = sadd.s32 1, %s25
      %p31 = scmp.ge.s32.totalorder %s30, 1
      %s32 = scalar_select %p31, 0, %s30
      %s33 = sadd.s32 1, %s24
      %s34 = scalar_select %p31, %s33, %s24
      %p35 = scmp.ge.s32.totalorder %s34, 2
      %s36 = scalar_select %p35, 0, %s34
      %s37 = sadd.s32 %s24, %s25
      %p38 = scmp.lt.s32.totalorder %s37, 1
      %s39 = scalar_select %p38, %s37, 1
      %s40 = sadd.s32 %s36, %s32
      %p41 = scmp.lt.s32.totalorder %s40, 1
      %s42 = scalar_select %p41, %s40, 1
      %s43 = ssub.s32 %s39, %s42
      %p44 = scmp.eq.s32.totalorder %s43, 0
      %s46 = sadd.s32 %s45, 1
      %s47 = scalar_select %p44, %s45, %s46
      %p50 = pneg %p44
      %p51 = scmp.eq.s32.totalorder %s17, 1
      %p52 = por %p50, %p51
      %p53 = scmp.ne.s32.totalorder %s45, %s48
      %p54 = scmp.eq.s32.totalorder %s17, 0
      %p55 = por %p53, %p54
      %p56 = scmp.ne.s32.totalorder %s45, %s48
      %p57 = scmp.eq.s32.totalorder %s22, 1
      %p58 = por %p56, %p57
      %p59 = scmp.ne.s32.totalorder %s48, %s49
      %p60 = scmp.eq.s32.totalorder %s22, 0
      %p61 = por %p59, %p60
      %p62 = scmp.ne.s32.totalorder %s48, %s49
      %p63 = scmp.eq.s32.totalorder %s23, 1
      %p64 = por %p62, %p63
      %p66 = scmp.ne.s32.totalorder %s49, %s65
      %p67 = scmp.eq.s32.totalorder %s23, 0
      %p68 = por %p66, %p67
      %s69 = sadd.s32 %s24, %s25
      %p70 = scmp.lt.s32.totalorder %s69, 1
      %s71 = scalar_select %p70, %s69, 1
      %s72 = sadd.s32 %s36, %s32
      %p73 = scmp.lt.s32.totalorder %s72, 1
      %s74 = scalar_select %p73, %s72, 1
      %s75 = ssub.s32 %s71, %s74
      %p76 = scmp.eq.s32.totalorder %s75, 0
      %s78 = sadd.s32 %s77, 1
      %s79 = scalar_select %p76, %s77, %s78
      %p82 = pneg %p76
      %p83 = scmp.eq.s32.totalorder %s17, 1
      %p84 = por %p82, %p83
      %p85 = scmp.ne.s32.totalorder %s77, %s80
      %p86 = scmp.eq.s32.totalorder %s17, 0
      %p87 = por %p85, %p86
      %p88 = scmp.ne.s32.totalorder %s77, %s80
      %p89 = scmp.eq.s32.totalorder %s22, 1
      %p90 = por %p88, %p89
      %p91 = scmp.ne.s32.totalorder %s80, %s81
      %p92 = scmp.eq.s32.totalorder %s22, 0
      %p93 = por %p91, %p92
      %p94 = scmp.ne.s32.totalorder %s80, %s81
      %p95 = scmp.eq.s32.totalorder %s23, 1
      %p96 = por %p94, %p95
      %p98 = scmp.ne.s32.totalorder %s81, %s97
      %p99 = scmp.eq.s32.totalorder %s23, 0
      %p100 = por %p98, %p99
      %s101 = ssub.s32 %s24, %s36
      %p102 = scmp.eq.s32.totalorder %s101, 0
      %s104 = sadd.s32 %s103, 1
      %s105 = scalar_select %p102, %s103, %s104
      %p108 = pneg %p102
      %p109 = scmp.eq.s32.totalorder %s17, 1
      %p110 = por %p108, %p109
      %p111 = scmp.ne.s32.totalorder %s103, %s106
      %p112 = scmp.eq.s32.totalorder %s17, 0
      %p113 = por %p111, %p112
      %p114 = scmp.ne.s32.totalorder %s103, %s106
      %p115 = scmp.eq.s32.totalorder %s22, 1
      %p116 = por %p114, %p115
      %p117 = scmp.ne.s32.totalorder %s106, %s107
      %p118 = scmp.eq.s32.totalorder %s22, 0
      %p119 = por %p117, %p118
      %p120 = scmp.ne.s32.totalorder %s106, %s107
      %p121 = scmp.eq.s32.totalorder %s23, 1
      %p122 = por %p120, %p121
      %p124 = scmp.ne.s32.totalorder %s107, %s123
      %p125 = scmp.eq.s32.totalorder %s23, 0
      %p126 = por %p124, %p125
      %p127 = scmp.le.s32.totalorder 1, %s17
      %p128 = scmp.lt.s32.totalorder %s17, 3
      %p129 = pnand %p127, %p128
      %p130 = pneg %p129
      // Predicated region
      $region9: #{tpu_custom_call.1} parent=5 // pred_check
        _
      $region10: #{tpu_custom_call.1} parent=5 // pred_check_branch
        %132 = sbr.rel (%p129) target = $region12
      $region11: #{tpu_custom_call.1} parent=5 // pred_region
        %s133 = ssub.s32 %s17, 1
      $region12: #{tpu_custom_call.1} parent=5 // pred_fallthru
        _
      %p134 = scmp.lt.s32.totalorder %s17, 2
      // Predicated region
      $region13: #{tpu_custom_call.1} parent=5 // pred_check
        %p135 = pneg %p134
      $region14: #{tpu_custom_call.1} parent=5 // pred_check_branch
        %137 = sbr.rel (%p135) target = $region16
      $region15: #{tpu_custom_call.1} parent=5 // pred_region
        // Predicated region
        $region17: #{tpu_custom_call.1} parent=15 // pred_check
          %p138 = pneg %p55
        $region18: #{tpu_custom_call.1} parent=15 // pred_check_branch
          %140 = sbr.rel (%p138) target = $region20
        $region19: #{tpu_custom_call.1} parent=15 // pred_region
          %s141 = sand.u32 %s45, 1
          %s142 = scalar_lea.sflag [#allocation3], %s141
          %s143 = sand.u32 %s45, 1
          %s144 = smul.addr %s143, 8
          %s145 = scalar_lea.vmem [#allocation2], %s144
          %s146 = sadd.s32 %s24, %s25
          %p147 = scmp.lt.s32.totalorder %s146, 1
          %s148 = scalar_select %p147, %s146, 1
          %s150 = ssub.s32 128, 128
          %151 = vsyncadd %s142, %s150
          %s152 = smul.addr %s148, 128
          %s153 = scalar_lea.hbm %s0, %s152
          %s155 = sshll.u32 %s145, 4
          %s156 = int_to_ptr.vmem [resolvable:$true] %s155
          %158 = dma.hbm_to_vmem [thread:$0]  %s153, 128, %s156, %s142
        $region20: #{tpu_custom_call.1} parent=15 // pred_fallthru
          _
        // Predicated region
        $region21: #{tpu_custom_call.1} parent=15 // pred_check
          %p159 = pneg %p87
        $region22: #{tpu_custom_call.1} parent=15 // pred_check_branch
          %161 = sbr.rel (%p159) target = $region24
        $region23: #{tpu_custom_call.1} parent=15 // pred_region
          %s162 = sand.u32 %s77, 1
          %s163 = scalar_lea.sflag [#allocation6], %s162
          %s164 = sand.u32 %s77, 1
          %s165 = smul.addr %s164, 8
          %s166 = scalar_lea.vmem [#allocation5], %s165
          %s167 = sadd.s32 %s24, %s25
          %p168 = scmp.lt.s32.totalorder %s167, 1
          %s169 = scalar_select %p168, %s167, 1
          %s171 = ssub.s32 128, 128
          %172 = vsyncadd %s163, %s171
          %s173 = smul.addr %s169, 128
          %s174 = scalar_lea.hbm %s1, %s173
          %s176 = sshll.u32 %s166, 4
          %s177 = int_to_ptr.vmem [resolvable:$true] %s176
          %179 = dma.hbm_to_vmem [thread:$0]  %s174, 128, %s177, %s163
        $region24: #{tpu_custom_call.1} parent=15 // pred_fallthru
          _
      $region16: #{tpu_custom_call.1} parent=5 // pred_fallthru
        _
      %p180 = scmp.le.s32.totalorder 1, %s17
      %p181 = scmp.lt.s32.totalorder %s17, 3
      %p182 = pnand %p180, %p181
      %p183 = pneg %p182
      // Predicated region
      $region25: #{tpu_custom_call.1} parent=5 // pred_check
        _
      $region26: #{tpu_custom_call.1} parent=5 // pred_check_branch
        %185 = sbr.rel (%p182) target = $region28
      $region27: #{tpu_custom_call.1} parent=5 // pred_region
        %s186 = ssub.s32 %s17, 1
        %s187 = sand.u32 %s48, 1
        %s188 = scalar_lea.sflag [#allocation3], %s187
        %s189 = sand.u32 %s48, 1
        %s190 = smul.addr %s189, 8
        %s191 = scalar_lea.vmem [#allocation2], %s190
        // Predicated region
        $region29: #{tpu_custom_call.1} parent=27 // pred_check
          %p192 = pneg %p61
        $region30: #{tpu_custom_call.1} parent=27 // pred_check_branch
          %194 = sbr.rel (%p192) target = $region32
        $region31: #{tpu_custom_call.1} parent=27 // pred_region
          %195 = dma.done %s188, 128
        $region32: #{tpu_custom_call.1} parent=27 // pred_fallthru
          _
        %s196 = sand.u32 %s80, 1
        %s197 = scalar_lea.sflag [#allocation6], %s196
        %s198 = sand.u32 %s80, 1
        %s199 = smul.addr %s198, 8
        %s200 = scalar_lea.vmem [#allocation5], %s199
        // Predicated region
        $region33: #{tpu_custom_call.1} parent=27 // pred_check
          %p201 = pneg %p93
        $region34: #{tpu_custom_call.1} parent=27 // pred_check_branch
          %203 = sbr.rel (%p201) target = $region36
        $region35: #{tpu_custom_call.1} parent=27 // pred_region
          %204 = dma.done %s197, 128
        $region36: #{tpu_custom_call.1} parent=27 // pred_fallthru
          _
        %s205 = sand.u32 %s48, 1
        %s206 = scalar_lea.sflag [#allocation3], %s205
        %s207 = sand.u32 %s48, 1
        %s208 = smul.addr %s207, 8
        %s209 = scalar_lea.vmem [#allocation2], %s208
        %p210 = pneg %p61
        %p211 = pneg %p58
        %s212 = sand.u32 %s80, 1
        %s213 = scalar_lea.sflag [#allocation6], %s212
        %s214 = sand.u32 %s80, 1
        %s215 = smul.addr %s214, 8
        %s216 = scalar_lea.vmem [#allocation5], %s215
        %p217 = pneg %p93
        %p218 = pneg %p90
        %p219 = pneg %p119
        %p220 = pneg %p116
        %s221 = sand.u32 %s106, 1
        %s222 = scalar_lea.sflag [#allocation4], %s221
        %s223 = sand.u32 %s106, 1
        %s224 = smul.addr %s223, 8
        %s225 = scalar_lea.vmem [#allocation7], %s224
        %s226 = sadd.s32 %s26, %s27
        %p227 = scmp.lt.s32.totalorder %s226, 1
        %s228 = scalar_select %p227, %s226, 1
        %s229 = sadd.s32 %s26, %s27
        %p230 = scmp.lt.s32.totalorder %s229, 1
        %s231 = scalar_select %p230, %s229, 1
        %p232 = scmp.eq.s32.totalorder %s27, 0
        // Predicated region
        $region37: #{tpu_custom_call.1} parent=27 // pred_check
          %p233 = pneg %p232
        $region38: #{tpu_custom_call.1} parent=27 // pred_check_branch
          %235 = sbr.rel (%p233) target = $region40
        $region39: #{tpu_custom_call.1} parent=27 // pred_region
          %236 = vst [vmem:[%s225] sm:$0xff] 0.0
        $region40: #{tpu_custom_call.1} parent=27 // pred_fallthru
          _
        %v237 = vld [vmem:[%s225] sm:$0xff]
        %v238 = vld [vmem:[%s191] sm:$0xff]
        %v239 = vld [vmem:[%s200] sm:$0xff]
        %v240 = vmax.f32 %v238, 1e-05
        %v241 = vmin.f32 %v240, 0.99999
        %v242 = vlog2.pop %v241
        %v243 = vmul.f32 %v242, 0.6931472
        %v244 = vmul.f32 %v239, %v243
        %v245 = vsub.f32 1.0, %v239
        %v246 = vsub.f32 1.0, %v241
        %v247 = vlog2.pop %v246
        %v248 = vmul.f32 %v247, 0.6931472
        %v249 = vmul.f32 %v245, %v248
        %v250 = vadd.f32 %v244, %v249
        %v251 = vadd.f32 %v250, 0.0
        %v252 = vadd.f32 %v251, 0.0
        %v253 = vadd.f32 %v237, %v252
        %254 = vst [vmem:[%s225] sm:$0xff] %v253
        %s255 = sand.u32 %s106, 1
        %s256 = scalar_lea.sflag [#allocation4], %s255
        %s257 = sand.u32 %s106, 1
        %s258 = smul.addr %s257, 8
        %s259 = scalar_lea.vmem [#allocation7], %s258
        // Predicated region
        $region41: #{tpu_custom_call.1} parent=27 // pred_check
          %p260 = pneg %p116
        $region42: #{tpu_custom_call.1} parent=27 // pred_check_branch
          %262 = sbr.rel (%p260) target = $region44
        $region43: #{tpu_custom_call.1} parent=27 // pred_region
          %s264 = ssub.s32 128, 128
          %265 = vsyncadd %s256, %s264
          %s266 = smul.addr %s26, 128
          %s267 = scalar_lea.hbm %s2, %s266
          %s269 = sshll.u32 %s259, 4
          %s270 = int_to_ptr.vmem [resolvable:$true] %s269
          %272 = dma.vmem_to_hbm [thread:$0]  %s270, 128, %s267, %s256
        $region44: #{tpu_custom_call.1} parent=27 // pred_fallthru
          _
      $region28: #{tpu_custom_call.1} parent=5 // pred_fallthru
        _
      %p273 = scmp.le.s32.totalorder 2, %s17
      // Predicated region
      $region45: #{tpu_custom_call.1} parent=5 // pred_check
        %p274 = pneg %p273
      $region46: #{tpu_custom_call.1} parent=5 // pred_check_branch
        %276 = sbr.rel (%p274) target = $region48
      $region47: #{tpu_custom_call.1} parent=5 // pred_region
        %s277 = ssub.s32 %s17, 2
        // Predicated region
        $region49: #{tpu_custom_call.1} parent=47 // pred_check
          %p278 = pneg %p122
        $region50: #{tpu_custom_call.1} parent=47 // pred_check_branch
          %280 = sbr.rel (%p278) target = $region52
        $region51: #{tpu_custom_call.1} parent=47 // pred_region
          %s281 = sand.u32 %s107, 1
          %s282 = scalar_lea.sflag [#allocation4], %s281
          %s283 = sand.u32 %s107, 1
          %s284 = smul.addr %s283, 8
          %s285 = scalar_lea.vmem [#allocation7], %s284
          %286 = dma.done %s282, 128
        $region52: #{tpu_custom_call.1} parent=47 // pred_fallthru
          _
      $region48: #{tpu_custom_call.1} parent=5 // pred_fallthru
        _
    $region6: #{tpu_custom_call.1} parent=1 // loop_footer
      %s21 = sadd.s32 1, %s17
    $region7: #{tpu_custom_call.1} parent=1 // loop_footer_branch
      %16 = sbr.rel target = $region3
    $region8: #{tpu_custom_call.1} parent=1 // loop_exit
      _
    %287 = vsyncpa [#allocation3], 1
    %s288 = scalar_lea.sflag [#allocation3], 1
    %289 = vsyncpa %s288, 1
    %290 = vsyncpa [#allocation6], 1
    %s291 = scalar_lea.sflag [#allocation6], 1
    %292 = vsyncpa %s291, 1
    %293 = vsyncpa [#allocation4], 1
    %s294 = scalar_lea.sflag [#allocation4], 1
    %295 = vsyncpa %s294, 1

</llo_original>
